<compile_context>
chip_gen: v5e
topology: v5e:2x2
jax: 0.10.0
libtpu: 0.0.40
codegen_flags: <defaults>
</compile_context>

<pallas_src>
import functools

import jax
import jax.numpy as jnp
from jax.experimental import pallas as pl
from jax.experimental.pallas import tpu as pltpu

EPS = 1e-5


def _pick_tile(dim, cap, align):
    """Largest divisor of `dim` that is <= cap and (aligned or == dim)."""
    cap = max(1, min(cap, dim))
    for t in range(cap, 0, -1):
        if dim % t == 0 and (t % align == 0 or t == dim):
            return t
    return dim


# ---------------------------------------------------------------------------
# Fused matmul + folded-BN shift + ReLU, K-tiled with a VMEM f32 accumulator.
# ---------------------------------------------------------------------------
def _mm_bn_relu_kernel(x_ref, w_ref, shift_ref, o_ref, acc_ref):
    k = pl.program_id(1)

    @pl.when(k == 0)
    def _():
        acc_ref[...] = jnp.zeros_like(acc_ref)

    acc_ref[...] += jnp.dot(x_ref[...], w_ref[...],
                            preferred_element_type=jnp.float32)

    @pl.when(k == pl.num_programs(1) - 1)
    def _():
        o_ref[...] = jnp.maximum(acc_ref[...] + shift_ref[...],
                                 0.0).astype(o_ref.dtype)


def matmul_bn_relu(x, w_scaled, shift, out_dtype=jnp.bfloat16):
    """relu(x @ w_scaled + shift); bf16 operands, f32 accumulate."""
    M, K = x.shape
    Kw, N = w_scaled.shape
    assert K == Kw
    tm = _pick_tile(M, 512, 8)
    if tm == M and M > 256:          # keep >= 2 row tiles (megacore sharding)
        tm = _pick_tile(M, M // 2, 8)
    tk = _pick_tile(K, 1024, 128)
    x_b = x.astype(jnp.bfloat16)
    w_b = w_scaled.astype(jnp.bfloat16)
    shift2 = shift.reshape(1, N).astype(jnp.float32)
    return pl.pallas_call(
        _mm_bn_relu_kernel,
        out_shape=jax.ShapeDtypeStruct((M, N), out_dtype),
        grid=(M // tm, K // tk),
        in_specs=[
            pl.BlockSpec((tm, tk), lambda i, k: (i, k)),
            pl.BlockSpec((tk, N), lambda i, k: (k, 0)),
            pl.BlockSpec((1, N), lambda i, k: (0, 0)),
        ],
        out_specs=pl.BlockSpec((tm, N), lambda i, k: (i, 0)),
        scratch_shapes=[pltpu.VMEM((tm, N), jnp.float32)],
        compiler_params=pltpu.CompilerParams(
            dimension_semantics=("parallel", "arbitrary")),
    )(x_b, w_b, shift2)


# ---------------------------------------------------------------------------
# 3x3 dilated conv + folded-BN shift + ReLU, no HBM im2col.
# Manual double-buffered DMA of halo row-slabs from the padded input (HBM),
# 9 tap matmuls accumulated in a VMEM f32 scratch.
# ---------------------------------------------------------------------------
def dilated_conv3x3_bn_relu(xp_rows, w_taps, shift, *, d, dmax,
                            n, h, w, c, cout, out_dtype=jnp.bfloat16):
    """xp_rows: (n*(h+2*dmax), w+2*dmax, c) bf16 zero-padded rows in HBM.
    w_taps : (9, c, cout) bf16, tap order (kh, kw), BN scale already folded.
    Returns (n*h*w, cout)."""
    hp = h + 2 * dmax
    wp = w + 2 * dmax
    th = _pick_tile(h, max(1, 512 // w), 1)   # output rows per grid step
    hs = th + 2 * d                           # fetched rows (with halo)
    hb_count = h // th
    steps = n * hb_count
    woff = dmax - d                           # column offset of tap (., 0)

    def kernel(xp_ref, w_ref, shift_ref, o_ref, slab, sem, acc_ref):
        step = pl.program_id(0)

        def copy_for(s, slot):
            img = s // hb_count
            hb = s % hb_count
            row0 = img * hp + hb * th + woff
            return pltpu.make_async_copy(
                xp_ref.at[pl.ds(row0, hs)], slab.at[slot], sem.at[slot])

        slot = step & 1

        @pl.when(step == 0)                    # prime the pipeline
        def _():
            copy_for(step, slot).start()

        copy_for(step, slot).wait()            # current halo slab is ready

        @pl.when(step + 1 < steps)             # prefetch next slab
        def _():
            copy_for(step + 1, 1 - slot).start()

        acc_ref[...] = jnp.zeros_like(acc_ref)
        cur = slab.at[slot]
        for kh in range(3):
            for kw in range(3):
                xt = cur[pl.ds(kh * d, th), pl.ds(woff + kw * d, w), :]
                acc_ref[...] += jnp.dot(xt.reshape(th * w, c),
                                        w_ref[kh * 3 + kw],
                                        preferred_element_type=jnp.float32)
        o_ref[...] = jnp.maximum(acc_ref[...] + shift_ref[...],
                                 0.0).astype(o_ref.dtype)

    shift2 = shift.reshape(1, cout).astype(jnp.float32)
    # NOTE: the grid is sequential ("arbitrary") because of the cross-step DMA
    # prefetch chain; each dilation branch runs on a single TensorCore.
    return pl.pallas_call(
        kernel,
        out_shape=jax.ShapeDtypeStruct((n * h * w, cout), out_dtype),
        grid=(steps,),
        in_specs=[
            pl.BlockSpec(memory_space=pl.ANY),              # padded input, HBM
            pl.BlockSpec((9, c, cout), lambda s: (0, 0, 0)),
            pl.BlockSpec((1, cout), lambda s: (0, 0)),
        ],
        out_specs=pl.BlockSpec((th * w, cout), lambda s: (s, 0)),
        scratch_shapes=[
            pltpu.VMEM((2, hs, wp, c), jnp.bfloat16),       # double buffer
            pltpu.SemaphoreType.DMA((2,)),
            pltpu.VMEM((th * w, cout), jnp.float32),        # f32 accumulator
        ],
        compiler_params=pltpu.CompilerParams(
            dimension_semantics=("arbitrary",)),
    )(xp_rows, w_taps, shift2)


# ---------------------------------------------------------------------------
# Fused conv_cat: relu(sum_b feat_b @ Wc_b + per-image pooled bias + shift).
# Avoids materializing the (M, 5*inner) concat and the HxW broadcast of the
# pooled branch.
# ---------------------------------------------------------------------------
def _cat_conv_kernel(f1_ref, f2_ref, f3_ref, f4_ref, bias_ref, wc_ref,
                     shift_ref, o_ref):
    acc = jnp.dot(f1_ref[...], wc_ref[0], preferred_element_type=jnp.float32)
    acc += jnp.dot(f2_ref[...], wc_ref[1], preferred_element_type=jnp.float32)
    acc += jnp.dot(f3_ref[...], wc_ref[2], preferred_element_type=jnp.float32)
    acc += jnp.dot(f4_ref[...], wc_ref[3], preferred_element_type=jnp.float32)
    y = acc + bias_ref[0] + shift_ref[...]
    o_ref[...] = jnp.maximum(y, 0.0).astype(o_ref.dtype)


def cat_conv_bn_relu(feats, pooled_bias, wc4_scaled, shift, rows_per_img):
    M, inner = feats[0].shape
    n_out = wc4_scaled.shape[-1]
    tm = _pick_tile(rows_per_img, 512, 8)     # each tile stays in one image
    assert rows_per_img % tm == 0 and M % rows_per_img == 0

    feat_spec = pl.BlockSpec((tm, inner), lambda i: (i, 0))
    return pl.pallas_call(
        _cat_conv_kernel,
        out_shape=jax.ShapeDtypeStruct((M, n_out), jnp.float32),
        grid=(M // tm,),
        in_specs=[
            feat_spec, feat_spec, feat_spec, feat_spec,
            pl.BlockSpec((1, 1, n_out),
                         lambda i: ((i * tm) // rows_per_img, 0, 0)),
            pl.BlockSpec((4, inner, n_out), lambda i: (0, 0, 0)),
            pl.BlockSpec((1, n_out), lambda i: (0, 0)),
        ],
        out_specs=pl.BlockSpec((tm, n_out), lambda i: (i, 0)),
        compiler_params=pltpu.CompilerParams(
            dimension_semantics=("parallel",)),
    )(feats[0], feats[1], feats[2], feats[3],
      pooled_bias.astype(jnp.float32),
      wc4_scaled.astype(jnp.bfloat16),
      shift.reshape(1, n_out).astype(jnp.float32))


# ---------------------------------------------------------------------------
# Tiled global average pool: sum over spatial chunks + one 1/(H*W) multiply.
# ---------------------------------------------------------------------------
def _mean_pool_kernel(x_ref, o_ref, acc_ref, *, inv_hw):
    s = pl.program_id(1)

    @pl.when(s == 0)
    def _():
        acc_ref[...] = jnp.zeros_like(acc_ref)

    acc_ref[...] += jnp.sum(x_ref[...], axis=1, keepdims=True)

    @pl.when(s == pl.num_programs(1) - 1)
    def _():
        o_ref[...] = acc_ref[...] * inv_hw


def global_mean_pool(x_nhwc):
    n, h, w, c = x_nhwc.shape
    hw = h * w
    ts = _pick_tile(hw, 1024, 8)
    x3 = x_nhwc.reshape(n, hw, c)
    out = pl.pallas_call(
        functools.partial(_mean_pool_kernel, inv_hw=1.0 / float(hw)),
        out_shape=jax.ShapeDtypeStruct((n, 1, c), jnp.float32),
        grid=(n, hw // ts),
        in_specs=[pl.BlockSpec((1, ts, c), lambda i, s: (i, s, 0))],
        out_specs=pl.BlockSpec((1, 1, c), lambda i, s: (i, 0, 0)),
        scratch_shapes=[pltpu.VMEM((1, 1, c), jnp.float32)],
        compiler_params=pltpu.CompilerParams(
            dimension_semantics=("parallel", "arbitrary")),
    )(x3)
    return out.reshape(n, c)


# ---------------------------------------------------------------------------
# Glue: BN folding, parameter init, full ASPP forward
# ---------------------------------------------------------------------------
def bn_fold(bn):
    scale = bn["gamma"] / jnp.sqrt(bn["var"] + EPS)
    shift = bn["beta"] - bn["mean"] * scale
    return scale, shift


def init_params(key, features, inner, out_features):
    keys = iter(jax.random.split(key, 64))

    def conv_w(shape):
        return 0.05 * jax.random.normal(next(keys), shape, jnp.float32)

    def bn(cn):
        return {
            "gamma": 1.0 + 0.1 * jax.random.normal(next(keys), (cn,), jnp.float32),
            "beta": 0.1 * jax.random.normal(next(keys), (cn,), jnp.float32),
            "mean": 0.1 * jax.random.normal(next(keys), (cn,), jnp.float32),
            "var": 1.0 + 0.1 * jax.random.uniform(next(keys), (cn,), jnp.float32),
        }

    p = {}
    p["b1_w"] = conv_w((inner, features, 1, 1))
    p["b1_bn"] = bn(inner)
    p["b2_w"] = conv_w((inner, features, 3, 3))
    p["b2_bn"] = bn(inner)
    p["b3_w"] = conv_w((inner, features, 3, 3))
    p["b3_bn"] = bn(inner)
    p["b4_w"] = conv_w((inner, features, 3, 3))
    p["b4_bn"] = bn(inner)
    p["b5_w"] = conv_w((inner, features, 1, 1))
    p["b5_bn"] = bn(inner)
    p["cat_w"] = conv_w((out_features, inner * 5, 1, 1))
    p["cat_bn"] = bn(out_features)
    return p


def aspp_forward(x_nchw, params, dilations=(6, 12, 18)):
    n, c, h, w = x_nchw.shape
    x_nhwc = jnp.transpose(x_nchw, (0, 2, 3, 1)).astype(jnp.float32)
    x_bf = x_nhwc.astype(jnp.bfloat16)
    M = n * h * w

    # branch1: 1x1 conv + BN + ReLU (BN scale folded in f32 before bf16 cast)
    s1, t1 = bn_fold(params["b1_bn"])
    w1 = params["b1_w"].reshape(params["b1_w"].shape[0], c).T * s1[None, :]
    feats = [matmul_bn_relu(x_bf.reshape(M, c), w1, t1)]

    # branches 2-4: 3x3 dilated convs; single shared zero-pad (dmax), no im2col
    dmax = max(dilations)
    xp = jnp.pad(x_bf, ((0, 0), (dmax, dmax), (dmax, dmax), (0, 0)))
    xp_rows = xp.reshape(n * (h + 2 * dmax), w + 2 * dmax, c)
    for name, d in zip(("b2", "b3", "b4"), dilations):
        wk = params[name + "_w"]                          # (inner, c, 3, 3)
        sc, sh = bn_fold(params[name + "_bn"])
        inner = wk.shape[0]
        wt = (jnp.transpose(wk, (2, 3, 1, 0)).reshape(9, c, inner)
              * sc[None, None, :]).astype(jnp.bfloat16)   # (9, c, inner)
        feats.append(dilated_conv3x3_bn_relu(
            xp_rows, wt, sh, d=d, dmax=dmax, n=n, h=h, w=w, c=c, cout=inner))

    # branch5: global average pool -> 1x1 conv + BN + ReLU (per-image vector)
    s5, t5 = bn_fold(params["b5_bn"])
    w5 = params["b5_w"].reshape(params["b5_w"].shape[0], c).T * s5[None, :]
    g = global_mean_pool(x_nhwc)                              # (n, c) f32
    g5 = matmul_bn_relu(g, w5, t5, out_dtype=jnp.float32)     # (n, inner) f32

    # conv_cat: fused sum of per-branch matmuls; pooled branch as per-image
    # bias (bilinear upsample of a 1x1 map, align_corners=True == broadcast).
    scat, tcat = bn_fold(params["cat_bn"])
    inner = g5.shape[1]
    wc = (params["cat_w"].reshape(params["cat_w"].shape[0], 5 * inner).T
          * scat[None, :])                                    # (5*inner, out)
    wc4 = wc[:4 * inner].reshape(4, inner, -1)
    pooled_bias = (g5 @ wc[4 * inner:]).reshape(n, 1, -1)     # (n, 1, out)
    out = cat_conv_bn_relu(feats, pooled_bias, wc4, tcat, rows_per_img=h * w)

    out_nhwc = out.reshape(n, h, w, -1)
    return jnp.transpose(out_nhwc, (0, 3, 1, 2))              # back to NCHW


# ---------------------------------------------------------------------------
# Pure-JAX f32 reference (lax convs) for correctness check
# ---------------------------------------------------------------------------
def _ref_bn_relu(x, bn):
    scale, shift = bn_fold(bn)
    return jnp.maximum(x * scale[None, :, None, None]
                       + shift[None, :, None, None], 0.0)


def ref_aspp(x, p, dilations=(6, 12, 18)):
    def conv(inp, wt, dil, pad):
        return jax.lax.conv_general_dilated(
            inp, wt, (1, 1), [(pad, pad), (pad, pad)],
            rhs_dilation=(dil, dil),
            dimension_numbers=("NCHW", "OIHW", "NCHW"))

    n, c, h, w = x.shape
    f1 = _ref_bn_relu(conv(x, p["b1_w"], 1, 0), p["b1_bn"])
    f2 = _ref_bn_relu(conv(x, p["b2_w"], dilations[0], dilations[0]), p["b2_bn"])
    f3 = _ref_bn_relu(conv(x, p["b3_w"], dilations[1], dilations[1]), p["b3_bn"])
    f4 = _ref_bn_relu(conv(x, p["b4_w"], dilations[2], dilations[2]), p["b4_bn"])
    g = jnp.mean(x, axis=(2, 3), keepdims=True)
    g = _ref_bn_relu(conv(g, p["b5_w"], 1, 0), p["b5_bn"])
    g = jnp.broadcast_to(g, (n, g.shape[1], h, w))
    cat = jnp.concatenate([f1, f2, f3, f4, g], axis=1)
    return _ref_bn_relu(conv(cat, p["cat_w"], 1, 0), p["cat_bn"])


# ---------------------------------------------------------------------------
if __name__ == "__main__":
    key = jax.random.PRNGKey(0)
    kx, kp = jax.random.split(key)

    batch, features, H, W = 2, 8, 16, 16
    inner_features, out_features = 16, 32
    dilations = (6, 12, 18)

    x = jax.random.normal(kx, (batch, features, H, W), jnp.float32)
    params = init_params(kp, features, inner_features, out_features)

    y = aspp_forward(x, params, dilations)
    y = jax.block_until_ready(y)

    assert y.shape == (batch, out_features, H, W)

    # Reference is pure f32; Pallas path uses bf16 MXU operands, so tolerance
    # is set for bf16 operand rounding (observed error ~1e-3 at these scales).
    y_ref = ref_aspp(x, params, dilations)
    if not jnp.allclose(y, y_ref, atol=3e-2, rtol=3e-2):
        raise SystemExit("MISMATCH vs reference")

    print("KERNEL_OK")
</pallas_src>

<mosaic_0001>
module attributes {stable_mosaic.version = 11 : i64} {
  func.func @_mm_bn_relu_kernel(%arg0: i32, %arg1: i32, %arg2: memref<256x8xbf16, #tpu.memory_space<vmem>>, %arg3: memref<8x16xbf16, #tpu.memory_space<vmem>>, %arg4: memref<1x16xf32, #tpu.memory_space<vmem>>, %arg5: memref<256x16xbf16, #tpu.memory_space<vmem>>, %arg6: memref<256x16xf32, #tpu.memory_space<vmem>>) attributes {dimension_semantics = [#tpu.dimension_semantics<parallel>, #tpu.dimension_semantics<arbitrary>], iteration_bounds = array<i64: 2, 1>, scalar_prefetch = 0 : i64, scratch_operands = 1 : i64, tpu.core_type = #tpu.core_type<tc>, window_params = [{transform_indices = @transform_0, window_bounds = array<i64: 256, 8>}, {transform_indices = @transform_1, window_bounds = array<i64: 8, 16>}, {pipeline_mode = #tpu.pipeline_mode<synchronous>, transform_indices = @transform_2, window_bounds = array<i64: 1, 16>}, {transform_indices = @transform_3, window_bounds = array<i64: 256, 16>}]} {
    %c0_i32 = arith.constant 0 : i32
    %0 = arith.cmpi eq, %arg1, %c0_i32 : i32
    %1 = arith.extui %0 : i1 to i32
    %c0_i32_0 = arith.constant 0 : i32
    %2 = arith.cmpi ne, %1, %c0_i32_0 : i32
    scf.if %2 {
      %cst_10 = arith.constant 0.000000e+00 : f32
      %12 = vector.broadcast %cst_10 : f32 to vector<256x16xf32>
      %c0_11 = arith.constant 0 : index
      %c0_12 = arith.constant 0 : index
      %13 = vector.load %arg6[%c0_11, %c0_12] : memref<256x16xf32, #tpu.memory_space<vmem>>, vector<256x16xf32>
      tpu.vector_store %arg6[%c0_11, %c0_12], %12 {strides = array<i32>} : memref<256x16xf32, #tpu.memory_space<vmem>>, vector<256x16xf32>,
    } else {
    }
    %c0 = arith.constant 0 : index
    %c0_1 = arith.constant 0 : index
    %3 = vector.load %arg6[%c0, %c0_1] : memref<256x16xf32, #tpu.memory_space<vmem>>, vector<256x16xf32>
    %c0_2 = arith.constant 0 : index
    %c0_3 = arith.constant 0 : index
    %4 = vector.load %arg2[%c0_2, %c0_3] : memref<256x8xbf16, #tpu.memory_space<vmem>>, vector<256x8xbf16>
    %c0_4 = arith.constant 0 : index
    %c0_5 = arith.constant 0 : index
    %5 = vector.load %arg3[%c0_4, %c0_5] : memref<8x16xbf16, #tpu.memory_space<vmem>>, vector<8x16xbf16>
    %cst = arith.constant dense<0.000000e+00> : vector<256x16xf32>
    %6 = tpu.matmul %4, %5, %cst {dimension_numbers = #tpu.dot_dimension_numbers<[1], [0], [0], [1], [0, 0, 1, 1], [], []>} : vector<256x8xbf16>, vector<8x16xbf16>, vector<256x16xf32> -> vector<256x16xf32>
    %7 = arith.addf %3, %6 : vector<256x16xf32>
    %c0_6 = arith.constant 0 : index
    %c0_7 = arith.constant 0 : index
    %8 = vector.load %arg6[%c0_6, %c0_7] : memref<256x16xf32, #tpu.memory_space<vmem>>, vector<256x16xf32>
    tpu.vector_store %arg6[%c0_6, %c0_7], %7 {strides = array<i32>} : memref<256x16xf32, #tpu.memory_space<vmem>>, vector<256x16xf32>,
    %c0_i32_8 = arith.constant 0 : i32
    %9 = arith.cmpi eq, %arg1, %c0_i32_8 : i32
    %10 = arith.extui %9 : i1 to i32
    %c0_i32_9 = arith.constant 0 : i32
    %11 = arith.cmpi ne, %10, %c0_i32_9 : i32
    scf.if %11 {
      %c0_10 = arith.constant 0 : index
      %c0_11 = arith.constant 0 : index
      %12 = vector.load %arg6[%c0_10, %c0_11] : memref<256x16xf32, #tpu.memory_space<vmem>>, vector<256x16xf32>
      %c0_12 = arith.constant 0 : index
      %c0_13 = arith.constant 0 : index
      %13 = vector.load %arg4[%c0_12, %c0_13] : memref<1x16xf32, #tpu.memory_space<vmem>>, vector<1x16xf32>
      %14 = vector.broadcast %13 : vector<1x16xf32> to vector<256x16xf32>
      %15 = arith.addf %12, %14 : vector<256x16xf32>
      %cst_14 = arith.constant 0.000000e+00 : f32
      %16 = vector.broadcast %cst_14 : f32 to vector<256x16xf32>
      %17 = arith.maximumf %15, %16 : vector<256x16xf32>
      %18 = arith.truncf %17 : vector<256x16xf32> to vector<256x16xbf16>
      %c0_15 = arith.constant 0 : index
      %c0_16 = arith.constant 0 : index
      %19 = vector.load %arg5[%c0_15, %c0_16] : memref<256x16xbf16, #tpu.memory_space<vmem>>, vector<256x16xbf16>
      tpu.vector_store %arg5[%c0_15, %c0_16], %18 {strides = array<i32>} : memref<256x16xbf16, #tpu.memory_space<vmem>>, vector<256x16xbf16>,
    } else {
    }
    return
  }
  func.func @transform_0(%arg0: i32, %arg1: i32) -> (i32, i32) {
    %c0_i32 = arith.constant 0 : i32
    return %arg0, %arg1 : i32, i32
  }
  func.func @transform_1(%arg0: i32, %arg1: i32) -> (i32, i32) {
    %c0_i32 = arith.constant 0 : i32
    %c0_i32_0 = arith.constant 0 : i32
    return %arg1, %c0_i32 : i32, i32
  }
  func.func @transform_2(%arg0: i32, %arg1: i32) -> (i32, i32) {
    %c0_i32 = arith.constant 0 : i32
    %c0_i32_0 = arith.constant 0 : i32
    %c0_i32_1 = arith.constant 0 : i32
    return %c0_i32, %c0_i32_0 : i32, i32
  }
  func.func @transform_3(%arg0: i32, %arg1: i32) -> (i32, i32) {
    %c0_i32 = arith.constant 0 : i32
    %c0_i32_0 = arith.constant 0 : i32
    return %arg0, %c0_i32 : i32, i32
  }
}

</mosaic_0001>

<llo_original>
// kernel: tpu_custom_call.1
$region0: #{tpu_custom_call.1}
  #allocation0 [shape = 'u32[]', space=smem, size = 0x4, offset = 0x4, fixed_abs, tag = 'smem constant byte address 0x4 - core index']
  #allocation1 [shape = 'u32[72,128]{1,0:T(1,128)}', space=vmem, size = 0x9000, scoped, tag = 'internal scratch']
  #allocation2 [shape = 'f32[256,16]{1,0:T(8,128)}', space=vmem, size = 0x20000, scoped, tag = 'scratch operand']
  %s0 = inlined_call_operand.vmem [shape: bf16[512,8], index: 0, kind: input, shape index: {}]
  %s1 = inlined_call_operand.vmem [shape: bf16[8,16], index: 1, kind: input, shape index: {}]
  %s2 = inlined_call_operand.vmem [shape: f32[1,16], index: 2, kind: input, shape index: {}]
  %s3 = inlined_call_operand.vmem [shape: bf16[512,16], index: 3, kind: output, shape index: {}]
  %s4 = sld [smem:[#allocation0]]
  $region53: #{tpu_custom_call.1} parent=0
    _
  %s6 = ssub.s32 1, %s4
  %s7 = scalar_select 0, %s6, %s4
  loop: start=0, step=1, limit=4
  $region2: #{tpu_custom_call.1} parent=0 // loop_pre_header
    _
  $region3: #{tpu_custom_call.1} parent=0 // loop_header
    %s9 = sphi 0, %s13
    %p10 = scmp.ge.s32.totalorder %s9, 4
    %s16 = sphi 0, %s28
    %s17 = sphi 0, %s24
    %s18 = sphi 0, %s16
    %s19 = sphi 0, %s17
    %s20 = sphi 0, %s18
    %s21 = sphi 0, %s19
    %s33 = sphi 0, %s35
    %s36 = sphi 0, %s33
    %s37 = sphi 0, %s36
    %s53 = sphi 0, %s37
    %s59 = sphi 0, %s61
    %s62 = sphi 0, %s59
    %s63 = sphi 0, %s62
    %s79 = sphi 0, %s63
    %s83 = sphi 0, %s83
    %s85 = sphi 0, %s83
    %s86 = sphi 0, %s85
    %s100 = sphi 0, %s86
    %s106 = sphi 0, %s108
    %s109 = sphi 0, %s106
    %s110 = sphi 0, %s109
    %s126 = sphi 0, %s110
  $region4: #{tpu_custom_call.1} parent=0 // loop_header_branch
    %12 = sbr.rel (%p10) target = $region8
  $region5: #{tpu_custom_call.1} parent=0 // loop_body
    %s14 = ssub.s32 %s9, 1
    %s15 = ssub.s32 %s9, 2
    %s22 = sadd.s32 1, %s17
    %p23 = scmp.ge.s32.totalorder %s22, 1
    %s24 = scalar_select %p23, 0, %s22
    %s25 = sadd.s32 1, %s16
    %s26 = scalar_select %p23, %s25, %s16
    %p27 = scmp.ge.s32.totalorder %s26, 2
    %s28 = scalar_select %p27, 0, %s26
    %s29 = ssub.s32 %s16, %s28
    %s30 = ssub.s32 %s17, %s24
    %s31 = sor.u32 %s29, %s30
    %p32 = scmp.eq.s32.totalorder %s31, 0
    %s34 = sadd.s32 %s33, 1
    %s35 = scalar_select %p32, %s33, %s34
    %p38 = pneg %p32
    %p39 = scmp.eq.s32.totalorder %s9, 1
    %p40 = por %p38, %p39
    %p41 = scmp.ne.s32.totalorder %s33, %s36
    %p42 = scmp.eq.s32.totalorder %s9, 0
    %p43 = por %p41, %p42
    %p44 = scmp.ne.s32.totalorder %s33, %s36
    %p45 = scmp.eq.s32.totalorder %s14, 1
    %p46 = por %p44, %p45
    %p47 = scmp.ne.s32.totalorder %s36, %s37
    %p48 = scmp.eq.s32.totalorder %s14, 0
    %p49 = por %p47, %p48
    %p50 = scmp.ne.s32.totalorder %s36, %s37
    %p51 = scmp.eq.s32.totalorder %s15, 1
    %p52 = por %p50, %p51
    %p54 = scmp.ne.s32.totalorder %s37, %s53
    %p55 = scmp.eq.s32.totalorder %s15, 0
    %p56 = por %p54, %p55
    %s57 = ssub.s32 %s17, %s24
    %p58 = scmp.eq.s32.totalorder %s57, 0
    %s60 = sadd.s32 %s59, 1
    %s61 = scalar_select %p58, %s59, %s60
    %p64 = pneg %p58
    %p65 = scmp.eq.s32.totalorder %s9, 1
    %p66 = por %p64, %p65
    %p67 = scmp.ne.s32.totalorder %s59, %s62
    %p68 = scmp.eq.s32.totalorder %s9, 0
    %p69 = por %p67, %p68
    %p70 = scmp.ne.s32.totalorder %s59, %s62
    %p71 = scmp.eq.s32.totalorder %s14, 1
    %p72 = por %p70, %p71
    %p73 = scmp.ne.s32.totalorder %s62, %s63
    %p74 = scmp.eq.s32.totalorder %s14, 0
    %p75 = por %p73, %p74
    %p76 = scmp.ne.s32.totalorder %s62, %s63
    %p77 = scmp.eq.s32.totalorder %s15, 1
    %p78 = por %p76, %p77
    %p80 = scmp.ne.s32.totalorder %s63, %s79
    %p81 = scmp.eq.s32.totalorder %s15, 0
    %p82 = por %p80, %p81
    %s84 = sadd.s32 %s83, 1
    %p87 = scmp.eq.s32.totalorder %s9, 1
    %p88 = scmp.ne.s32.totalorder %s83, %s85
    %p89 = scmp.eq.s32.totalorder %s9, 0
    %p90 = por %p88, %p89
    %p91 = scmp.ne.s32.totalorder %s83, %s85
    %p92 = scmp.eq.s32.totalorder %s14, 1
    %p93 = por %p91, %p92
    %p94 = scmp.ne.s32.totalorder %s85, %s86
    %p95 = scmp.eq.s32.totalorder %s14, 0
    %p96 = por %p94, %p95
    %p97 = scmp.ne.s32.totalorder %s85, %s86
    %p98 = scmp.eq.s32.totalorder %s15, 1
    %p99 = por %p97, %p98
    %p101 = scmp.ne.s32.totalorder %s86, %s100
    %p102 = scmp.eq.s32.totalorder %s15, 0
    %p103 = por %p101, %p102
    %s104 = ssub.s32 %s16, %s28
    %p105 = scmp.eq.s32.totalorder %s104, 0
    %s107 = sadd.s32 %s106, 1
    %s108 = scalar_select %p105, %s106, %s107
    %p111 = pneg %p105
    %p112 = scmp.eq.s32.totalorder %s9, 1
    %p113 = por %p111, %p112
    %p114 = scmp.ne.s32.totalorder %s106, %s109
    %p115 = scmp.eq.s32.totalorder %s9, 0
    %p116 = por %p114, %p115
    %p117 = scmp.ne.s32.totalorder %s106, %s109
    %p118 = scmp.eq.s32.totalorder %s14, 1
    %p119 = por %p117, %p118
    %p120 = scmp.ne.s32.totalorder %s109, %s110
    %p121 = scmp.eq.s32.totalorder %s14, 0
    %p122 = por %p120, %p121
    %p123 = scmp.ne.s32.totalorder %s109, %s110
    %p124 = scmp.eq.s32.totalorder %s15, 1
    %p125 = por %p123, %p124
    %p127 = scmp.ne.s32.totalorder %s110, %s126
    %p128 = scmp.eq.s32.totalorder %s15, 0
    %p129 = por %p127, %p128
    %p130 = scmp.le.s32.totalorder 1, %s9
    %p131 = scmp.lt.s32.totalorder %s9, 3
    %p132 = pnand %p130, %p131
    %p133 = pneg %p132
    // Predicated region
    $region9: #{tpu_custom_call.1} parent=5 // pred_check
      _
    $region10: #{tpu_custom_call.1} parent=5 // pred_check_branch
      %135 = sbr.rel (%p132) target = $region12
    $region11: #{tpu_custom_call.1} parent=5 // pred_region
      %s136 = ssub.s32 %s9, 1
      // Predicated region
      $region13: #{tpu_custom_call.1} parent=11 // pred_check
        %p137 = pneg %p75
      $region14: #{tpu_custom_call.1} parent=11 // pred_check_branch
        %139 = sbr.rel (%p137) target = $region16
      $region15: #{tpu_custom_call.1} parent=11 // pred_region
        %p140 = scmp.lt.s32.totalorder %s19, 0
        %s141 = scalar_select %p140, %s19, 0
        %s142 = smul.addr %s141, 4
        %s143 = scalar_lea.vmem %s1, %s142
      $region16: #{tpu_custom_call.1} parent=11 // pred_fallthru
        _
      // Predicated region
      $region17: #{tpu_custom_call.1} parent=11 // pred_check
        %p144 = pneg %p96
      $region18: #{tpu_custom_call.1} parent=11 // pred_check_branch
        %146 = sbr.rel (%p144) target = $region20
      $region19: #{tpu_custom_call.1} parent=11 // pred_region
        _
      $region20: #{tpu_custom_call.1} parent=11 // pred_fallthru
        _
    $region12: #{tpu_custom_call.1} parent=5 // pred_fallthru
      _
    %p147 = scmp.lt.s32.totalorder %s9, 2
    // Predicated region
    $region21: #{tpu_custom_call.1} parent=5 // pred_check
      %p148 = pneg %p147
    $region22: #{tpu_custom_call.1} parent=5 // pred_check_branch
      %150 = sbr.rel (%p148) target = $region24
    $region23: #{tpu_custom_call.1} parent=5 // pred_region
      // Predicated region
      $region25: #{tpu_custom_call.1} parent=23 // pred_check
        %p151 = pneg %p43
      $region26: #{tpu_custom_call.1} parent=23 // pred_check_branch
        %153 = sbr.rel (%p151) target = $region28
      $region27: #{tpu_custom_call.1} parent=23 // pred_region
        %s154 = smul.u32 32, %s16
        %p155 = scmp.lt.s32.totalorder %s154, 63
        %s156 = scalar_select %p155, %s154, 63
        %p157 = scmp.lt.s32.totalorder %s17, 0
        %s158 = scalar_select %p157, %s17, 0
        %s159 = sadd.s32 %s158, %s156
        %s160 = smul.addr %s159, 4
        %s161 = scalar_lea.vmem %s0, %s160
        %s162 = smul.u32 32, %s16
      $region28: #{tpu_custom_call.1} parent=23 // pred_fallthru
        _
    $region24: #{tpu_custom_call.1} parent=5 // pred_fallthru
      _
    %p163 = scmp.le.s32.totalorder 1, %s9
    %p164 = scmp.lt.s32.totalorder %s9, 3
    %p165 = pnand %p163, %p164
    %p166 = pneg %p165
    // Predicated region
    $region29: #{tpu_custom_call.1} parent=5 // pred_check
      _
    $region30: #{tpu_custom_call.1} parent=5 // pred_check_branch
      %168 = sbr.rel (%p165) target = $region32
    $region31: #{tpu_custom_call.1} parent=5 // pred_region
      %s169 = ssub.s32 %s9, 1
      %s170 = smul.u32 32, %s18
      %p171 = scmp.lt.s32.totalorder %s170, 63
      %s172 = scalar_select %p171, %s170, 63
      %p173 = scmp.lt.s32.totalorder %s19, 0
      %s174 = scalar_select %p173, %s19, 0
      %s175 = sadd.s32 %s174, %s172
      %s176 = smul.addr %s175, 4
      %s177 = scalar_lea.vmem %s0, %s176
      %p178 = pneg %p49
      %p179 = pneg %p46
      %p180 = scmp.lt.s32.totalorder %s19, 0
      %s181 = scalar_select %p180, %s19, 0
      %s182 = smul.addr %s181, 4
      %s183 = scalar_lea.vmem %s1, %s182
      %p184 = pneg %p75
      %p185 = pneg %p72
      %p186 = pneg %p96
      %p187 = pneg %p93
      %p188 = pneg %p122
      %p189 = pneg %p119
      %s190 = smul.u32 32, %s18
      %p191 = scmp.lt.s32.totalorder %s190, 63
      %s192 = scalar_select %p191, %s190, 63
      %s193 = smul.addr %s192, 4
      %s194 = scalar_lea.vmem %s3, %s193
      %s195 = smul.u32 32, %s18
      %p196 = scmp.lt.s32.totalorder %s195, 63
      %s197 = scalar_select %p196, %s195, 63
      %p198 = scmp.lt.s32.totalorder %s19, 0
      %s199 = scalar_select %p198, %s19, 0
      %s200 = sadd.s32 %s199, %s197
      %s201 = smul.addr %s200, 4
      %s202 = scalar_lea.vmem %s0, %s201
      %s203 = smul.u32 32, %s18
      %p204 = scmp.lt.s32.totalorder %s19, 0
      %s205 = scalar_select %p204, %s19, 0
      %s206 = smul.addr %s205, 4
      %s207 = scalar_lea.vmem %s1, %s206
      %s208 = smul.u32 32, %s18
      %p209 = scmp.lt.s32.totalorder %s208, 63
      %s210 = scalar_select %p209, %s208, 63
      %s211 = smul.addr %s210, 4
      %s212 = scalar_lea.vmem %s3, %s211
      %s213 = smul.u32 32, %s18
      %p215 = scmp.eq.s32.totalorder %s19, 0
      // Predicated region
      $region33: #{tpu_custom_call.1} parent=31 // pred_check
        %p216 = pneg %p215
      $region34: #{tpu_custom_call.1} parent=31 // pred_check_branch
        %218 = sbr.rel (%p216) target = $region36
      $region35: #{tpu_custom_call.1} parent=31 // pred_region
        %vm219 = vcmask 130048
        %220 = vst.msk [vmem:[#allocation2] sm:$0xff] %vm219, 0.0
        %221 = vst.msk [vmem:[#allocation2 + $0x8] sm:$0xff] %vm219, 0.0
        %222 = vst.msk [vmem:[#allocation2 + $0x10] sm:$0xff] %vm219, 0.0
        %223 = vst.msk [vmem:[#allocation2 + $0x18] sm:$0xff] %vm219, 0.0
        %224 = vst.msk [vmem:[#allocation2 + $0x20] sm:$0xff] %vm219, 0.0
        %225 = vst.msk [vmem:[#allocation2 + $0x28] sm:$0xff] %vm219, 0.0
        %226 = vst.msk [vmem:[#allocation2 + $0x30] sm:$0xff] %vm219, 0.0
        %227 = vst.msk [vmem:[#allocation2 + $0x38] sm:$0xff] %vm219, 0.0
        %228 = vst.msk [vmem:[#allocation2 + $0x40] sm:$0xff] %vm219, 0.0
        %229 = vst.msk [vmem:[#allocation2 + $0x48] sm:$0xff] %vm219, 0.0
        %230 = vst.msk [vmem:[#allocation2 + $0x50] sm:$0xff] %vm219, 0.0
        %231 = vst.msk [vmem:[#allocation2 + $0x58] sm:$0xff] %vm219, 0.0
        %232 = vst.msk [vmem:[#allocation2 + $0x60] sm:$0xff] %vm219, 0.0
        %233 = vst.msk [vmem:[#allocation2 + $0x68] sm:$0xff] %vm219, 0.0
        %234 = vst.msk [vmem:[#allocation2 + $0x70] sm:$0xff] %vm219, 0.0
        %235 = vst.msk [vmem:[#allocation2 + $0x78] sm:$0xff] %vm219, 0.0
        %236 = vst.msk [vmem:[#allocation2 + $0x80] sm:$0xff] %vm219, 0.0
        %237 = vst.msk [vmem:[#allocation2 + $0x88] sm:$0xff] %vm219, 0.0
        %238 = vst.msk [vmem:[#allocation2 + $0x90] sm:$0xff] %vm219, 0.0
        %239 = vst.msk [vmem:[#allocation2 + $0x98] sm:$0xff] %vm219, 0.0
        %240 = vst.msk [vmem:[#allocation2 + $0xa0] sm:$0xff] %vm219, 0.0
        %241 = vst.msk [vmem:[#allocation2 + $0xa8] sm:$0xff] %vm219, 0.0
        %242 = vst.msk [vmem:[#allocation2 + $0xb0] sm:$0xff] %vm219, 0.0
        %243 = vst.msk [vmem:[#allocation2 + $0xb8] sm:$0xff] %vm219, 0.0
        %244 = vst.msk [vmem:[#allocation2 + $0xc0] sm:$0xff] %vm219, 0.0
        %245 = vst.msk [vmem:[#allocation2 + $0xc8] sm:$0xff] %vm219, 0.0
        %246 = vst.msk [vmem:[#allocation2 + $0xd0] sm:$0xff] %vm219, 0.0
        %247 = vst.msk [vmem:[#allocation2 + $0xd8] sm:$0xff] %vm219, 0.0
        %248 = vst.msk [vmem:[#allocation2 + $0xe0] sm:$0xff] %vm219, 0.0
        %249 = vst.msk [vmem:[#allocation2 + $0xe8] sm:$0xff] %vm219, 0.0
        %250 = vst.msk [vmem:[#allocation2 + $0xf0] sm:$0xff] %vm219, 0.0
        %251 = vst.msk [vmem:[#allocation2 + $0xf8] sm:$0xff] %vm219, 0.0
      $region36: #{tpu_custom_call.1} parent=31 // pred_fallthru
        _
      %v252 = vld [vmem:[#allocation2] sm:$0xff]
      %v253 = vld [vmem:[#allocation2 + $0x8] sm:$0xff]
      %v254 = vld [vmem:[#allocation2 + $0x10] sm:$0xff]
      %v255 = vld [vmem:[#allocation2 + $0x18] sm:$0xff]
      %v256 = vld [vmem:[#allocation2 + $0x20] sm:$0xff]
      %v257 = vld [vmem:[#allocation2 + $0x28] sm:$0xff]
      %v258 = vld [vmem:[#allocation2 + $0x30] sm:$0xff]
      %v259 = vld [vmem:[#allocation2 + $0x38] sm:$0xff]
      %v260 = vld [vmem:[#allocation2 + $0x40] sm:$0xff]
      %v261 = vld [vmem:[#allocation2 + $0x48] sm:$0xff]
      %v262 = vld [vmem:[#allocation2 + $0x50] sm:$0xff]
      %v263 = vld [vmem:[#allocation2 + $0x58] sm:$0xff]
      %v264 = vld [vmem:[#allocation2 + $0x60] sm:$0xff]
      %v265 = vld [vmem:[#allocation2 + $0x68] sm:$0xff]
      %v266 = vld [vmem:[#allocation2 + $0x70] sm:$0xff]
      %v267 = vld [vmem:[#allocation2 + $0x78] sm:$0xff]
      %v268 = vld [vmem:[#allocation2 + $0x80] sm:$0xff]
      %v269 = vld [vmem:[#allocation2 + $0x88] sm:$0xff]
      %v270 = vld [vmem:[#allocation2 + $0x90] sm:$0xff]
      %v271 = vld [vmem:[#allocation2 + $0x98] sm:$0xff]
      %v272 = vld [vmem:[#allocation2 + $0xa0] sm:$0xff]
      %v273 = vld [vmem:[#allocation2 + $0xa8] sm:$0xff]
      %v274 = vld [vmem:[#allocation2 + $0xb0] sm:$0xff]
      %v275 = vld [vmem:[#allocation2 + $0xb8] sm:$0xff]
      %v276 = vld [vmem:[#allocation2 + $0xc0] sm:$0xff]
      %v277 = vld [vmem:[#allocation2 + $0xc8] sm:$0xff]
      %v278 = vld [vmem:[#allocation2 + $0xd0] sm:$0xff]
      %v279 = vld [vmem:[#allocation2 + $0xd8] sm:$0xff]
      %v280 = vld [vmem:[#allocation2 + $0xe0] sm:$0xff]
      %v281 = vld [vmem:[#allocation2 + $0xe8] sm:$0xff]
      %v282 = vld [vmem:[#allocation2 + $0xf0] sm:$0xff]
      %v283 = vld [vmem:[#allocation2 + $0xf8] sm:$0xff]
      %v284 = vld [vmem:[%s202] sm:$0xf]
      %v285 = vld [vmem:[%s202 + $0x4] sm:$0xf]
      %v286 = vld [vmem:[%s202 + $0x8] sm:$0xf]
      %v287 = vld [vmem:[%s202 + $0xc] sm:$0xf]
      %v288 = vld [vmem:[%s202 + $0x10] sm:$0xf]
      %v289 = vld [vmem:[%s202 + $0x14] sm:$0xf]
      %v290 = vld [vmem:[%s202 + $0x18] sm:$0xf]
      %v291 = vld [vmem:[%s202 + $0x1c] sm:$0xf]
      %v292 = vld [vmem:[%s202 + $0x20] sm:$0xf]
      %v293 = vld [vmem:[%s202 + $0x24] sm:$0xf]
      %v294 = vld [vmem:[%s202 + $0x28] sm:$0xf]
      %v295 = vld [vmem:[%s202 + $0x2c] sm:$0xf]
      %v296 = vld [vmem:[%s202 + $0x30] sm:$0xf]
      %v297 = vld [vmem:[%s202 + $0x34] sm:$0xf]
      %v298 = vld [vmem:[%s202 + $0x38] sm:$0xf]
      %v299 = vld [vmem:[%s202 + $0x3c] sm:$0xf]
      %v300 = vld [vmem:[%s202 + $0x40] sm:$0xf]
      %v301 = vld [vmem:[%s202 + $0x44] sm:$0xf]
      %v302 = vld [vmem:[%s202 + $0x48] sm:$0xf]
      %v303 = vld [vmem:[%s202 + $0x4c] sm:$0xf]
      %v304 = vld [vmem:[%s202 + $0x50] sm:$0xf]
      %v305 = vld [vmem:[%s202 + $0x54] sm:$0xf]
      %v306 = vld [vmem:[%s202 + $0x58] sm:$0xf]
      %v307 = vld [vmem:[%s202 + $0x5c] sm:$0xf]
      %v308 = vld [vmem:[%s202 + $0x60] sm:$0xf]
      %v309 = vld [vmem:[%s202 + $0x64] sm:$0xf]
      %v310 = vld [vmem:[%s202 + $0x68] sm:$0xf]
      %v311 = vld [vmem:[%s202 + $0x6c] sm:$0xf]
      %v312 = vld [vmem:[%s202 + $0x70] sm:$0xf]
      %v313 = vld [vmem:[%s202 + $0x74] sm:$0xf]
      %v314 = vld [vmem:[%s202 + $0x78] sm:$0xf]
      %v315 = vld [vmem:[%s202 + $0x7c] sm:$0xf]
      %v316 = vld [vmem:[%s207] sm:$0xf]
      %v349 = vunpack.c.l.b16 %v284
      %v350 = vunpack.c.l.b16 %v285
      %v351 = vunpack.c.l.b16 %v286
      %v352 = vunpack.c.l.b16 %v287
      %v353 = vunpack.c.l.b16 %v288
      %v354 = vunpack.c.l.b16 %v289
      %v355 = vunpack.c.l.b16 %v290
      %v356 = vunpack.c.l.b16 %v291
      %v357 = vunpack.c.l.b16 %v292
      %v358 = vunpack.c.l.b16 %v293
      %v359 = vunpack.c.l.b16 %v294
      %v360 = vunpack.c.l.b16 %v295
      %v361 = vunpack.c.l.b16 %v296
      %v362 = vunpack.c.l.b16 %v297
      %v363 = vunpack.c.l.b16 %v298
      %v364 = vunpack.c.l.b16 %v299
      %v365 = vunpack.c.l.b16 %v300
      %v366 = vunpack.c.l.b16 %v301
      %v367 = vunpack.c.l.b16 %v302
      %v368 = vunpack.c.l.b16 %v303
      %v369 = vunpack.c.l.b16 %v304
      %v370 = vunpack.c.l.b16 %v305
      %v371 = vunpack.c.l.b16 %v306
      %v372 = vunpack.c.l.b16 %v307
      %v373 = vunpack.c.l.b16 %v308
      %v374 = vunpack.c.l.b16 %v309
      %v375 = vunpack.c.l.b16 %v310
      %v376 = vunpack.c.l.b16 %v311
      %v377 = vunpack.c.l.b16 %v312
      %v378 = vunpack.c.l.b16 %v313
      %v379 = vunpack.c.l.b16 %v314
      %v380 = vunpack.c.l.b16 %v315
      %v381 = vpack.c.b16 %v350, %v349
      %v382 = vpack.c.b16 %v352, %v351
      %v383 = vpack.c.b16 %v354, %v353
      %v384 = vpack.c.b16 %v356, %v355
      %v385 = vpack.c.b16 %v358, %v357
      %v386 = vpack.c.b16 %v360, %v359
      %v387 = vpack.c.b16 %v362, %v361
      %v388 = vpack.c.b16 %v364, %v363
      %v389 = vpack.c.b16 %v366, %v365
      %v390 = vpack.c.b16 %v368, %v367
      %v391 = vpack.c.b16 %v370, %v369
      %v392 = vpack.c.b16 %v372, %v371
      %v393 = vpack.c.b16 %v374, %v373
      %v394 = vpack.c.b16 %v376, %v375
      %v395 = vpack.c.b16 %v378, %v377
      %v396 = vpack.c.b16 %v380, %v379
      %vm397 = vcmask 64512
      %v399 = vsel %vm397, %v381, 0
      %v402 = vsel %vm397, %v382, 0
      %v405 = vsel %vm397, %v383, 0
      %v408 = vsel %vm397, %v384, 0
      %v411 = vsel %vm397, %v385, 0
      %v414 = vsel %vm397, %v386, 0
      %v417 = vsel %vm397, %v387, 0
      %v420 = vsel %vm397, %v388, 0
      %v423 = vsel %vm397, %v389, 0
      %v426 = vsel %vm397, %v390, 0
      %v429 = vsel %vm397, %v391, 0
      %v432 = vsel %vm397, %v392, 0
      %v435 = vsel %vm397, %v393, 0
      %v438 = vsel %vm397, %v394, 0
      %v441 = vsel %vm397, %v395, 0
      %v444 = vsel %vm397, %v396, 0
      %vm446 = vcmask 1043456
      %v448 = vsel %vm446, %v316, 0
      %450 = vmatpush.bf16.msra.mxu0 0
      %451 = vmatpush.bf16.msra.mxu0 0
      %452 = vmatpush.bf16.msra.mxu0 0
      %453 = vmatpush.bf16.msra.mxu0 0
      %454 = vmatpush.bf16.msra.mxu0 0
      %455 = vmatpush.bf16.msra.mxu0 0
      %456 = vmatpush.bf16.msra.mxu0 0
      %457 = vmatpush.bf16.msra.mxu0 %v448
      %458 = vmatmul.bf16.gmra.mxu0 %v399
      %v459 = vpop.f32.mrf.mxu0
      %v460 = vadd.f32 0.0, %v459
      %v461 = vpop.f32.mrf.mxu0
      %v462 = vadd.f32 0.0, %v461
      %463 = vmatmul.bf16.gmra.mxu0 %v402
      %v464 = vpop.f32.mrf.mxu0
      %v465 = vadd.f32 0.0, %v464
      %v466 = vpop.f32.mrf.mxu0
      %v467 = vadd.f32 0.0, %v466
      %468 = vmatmul.bf16.gmra.mxu0 %v405
      %v469 = vpop.f32.mrf.mxu0
      %v470 = vadd.f32 0.0, %v469
      %v471 = vpop.f32.mrf.mxu0
      %v472 = vadd.f32 0.0, %v471
      %473 = vmatmul.bf16.gmra.mxu0 %v408
      %v474 = vpop.f32.mrf.mxu0
      %v475 = vadd.f32 0.0, %v474
      %v476 = vpop.f32.mrf.mxu0
      %v477 = vadd.f32 0.0, %v476
      %478 = vmatmul.bf16.gmra.mxu0 %v411
      %v479 = vpop.f32.mrf.mxu0
      %v480 = vadd.f32 0.0, %v479
      %v481 = vpop.f32.mrf.mxu0
      %v482 = vadd.f32 0.0, %v481
      %483 = vmatmul.bf16.gmra.mxu0 %v414
      %v484 = vpop.f32.mrf.mxu0
      %v485 = vadd.f32 0.0, %v484
      %v486 = vpop.f32.mrf.mxu0
      %v487 = vadd.f32 0.0, %v486
      %488 = vmatmul.bf16.gmra.mxu0 %v417
      %v489 = vpop.f32.mrf.mxu0
      %v490 = vadd.f32 0.0, %v489
      %v491 = vpop.f32.mrf.mxu0
      %v492 = vadd.f32 0.0, %v491
      %493 = vmatmul.bf16.gmra.mxu0 %v420
      %v494 = vpop.f32.mrf.mxu0
      %v495 = vadd.f32 0.0, %v494
      %v496 = vpop.f32.mrf.mxu0
      %v497 = vadd.f32 0.0, %v496
      %498 = vmatmul.bf16.gmra.mxu0 %v423
      %v499 = vpop.f32.mrf.mxu0
      %v500 = vadd.f32 0.0, %v499
      %v501 = vpop.f32.mrf.mxu0
      %v502 = vadd.f32 0.0, %v501
      %503 = vmatmul.bf16.gmra.mxu0 %v426
      %v504 = vpop.f32.mrf.mxu0
      %v505 = vadd.f32 0.0, %v504
      %v506 = vpop.f32.mrf.mxu0
      %v507 = vadd.f32 0.0, %v506
      %508 = vmatmul.bf16.gmra.mxu0 %v429
      %v509 = vpop.f32.mrf.mxu0
      %v510 = vadd.f32 0.0, %v509
      %v511 = vpop.f32.mrf.mxu0
      %v512 = vadd.f32 0.0, %v511
      %513 = vmatmul.bf16.gmra.mxu0 %v432
      %v514 = vpop.f32.mrf.mxu0
      %v515 = vadd.f32 0.0, %v514
      %v516 = vpop.f32.mrf.mxu0
      %v517 = vadd.f32 0.0, %v516
      %518 = vmatmul.bf16.gmra.mxu0 %v435
      %v519 = vpop.f32.mrf.mxu0
      %v520 = vadd.f32 0.0, %v519
      %v521 = vpop.f32.mrf.mxu0
      %v522 = vadd.f32 0.0, %v521
      %523 = vmatmul.bf16.gmra.mxu0 %v438
      %v524 = vpop.f32.mrf.mxu0
      %v525 = vadd.f32 0.0, %v524
      %v526 = vpop.f32.mrf.mxu0
      %v527 = vadd.f32 0.0, %v526
      %528 = vmatmul.bf16.gmra.mxu0 %v441
      %v529 = vpop.f32.mrf.mxu0
      %v530 = vadd.f32 0.0, %v529
      %v531 = vpop.f32.mrf.mxu0
      %v532 = vadd.f32 0.0, %v531
      %533 = vmatmul.bf16.gmra.mxu0 %v444
      %v534 = vpop.f32.mrf.mxu0
      %v535 = vadd.f32 0.0, %v534
      %v536 = vpop.f32.mrf.mxu0
      %v537 = vadd.f32 0.0, %v536
      %538 = vdwg.mxu0
      %v539 = vadd.f32 %v252, %v460
      %v540 = vadd.f32 %v253, %v462
      %v541 = vadd.f32 %v254, %v465
      %v542 = vadd.f32 %v255, %v467
      %v543 = vadd.f32 %v256, %v470
      %v544 = vadd.f32 %v257, %v472
      %v545 = vadd.f32 %v258, %v475
      %v546 = vadd.f32 %v259, %v477
      %v547 = vadd.f32 %v260, %v480
      %v548 = vadd.f32 %v261, %v482
      %v549 = vadd.f32 %v262, %v485
      %v550 = vadd.f32 %v263, %v487
      %v551 = vadd.f32 %v264, %v490
      %v552 = vadd.f32 %v265, %v492
      %v553 = vadd.f32 %v266, %v495
      %v554 = vadd.f32 %v267, %v497
      %v555 = vadd.f32 %v268, %v500
      %v556 = vadd.f32 %v269, %v502
      %v557 = vadd.f32 %v270, %v505
      %v558 = vadd.f32 %v271, %v507
      %v559 = vadd.f32 %v272, %v510
      %v560 = vadd.f32 %v273, %v512
      %v561 = vadd.f32 %v274, %v515
      %v562 = vadd.f32 %v275, %v517
      %v563 = vadd.f32 %v276, %v520
      %v564 = vadd.f32 %v277, %v522
      %v565 = vadd.f32 %v278, %v525
      %v566 = vadd.f32 %v279, %v527
      %v567 = vadd.f32 %v280, %v530
      %v568 = vadd.f32 %v281, %v532
      %v569 = vadd.f32 %v282, %v535
      %v570 = vadd.f32 %v283, %v537
      %vm571 = vcmask 130048
      %572 = vst.msk [vmem:[#allocation2] sm:$0xff] %vm571, %v539
      %573 = vst.msk [vmem:[#allocation2 + $0x8] sm:$0xff] %vm571, %v540
      %574 = vst.msk [vmem:[#allocation2 + $0x10] sm:$0xff] %vm571, %v541
      %575 = vst.msk [vmem:[#allocation2 + $0x18] sm:$0xff] %vm571, %v542
      %576 = vst.msk [vmem:[#allocation2 + $0x20] sm:$0xff] %vm571, %v543
      %577 = vst.msk [vmem:[#allocation2 + $0x28] sm:$0xff] %vm571, %v544
      %578 = vst.msk [vmem:[#allocation2 + $0x30] sm:$0xff] %vm571, %v545
      %579 = vst.msk [vmem:[#allocation2 + $0x38] sm:$0xff] %vm571, %v546
      %580 = vst.msk [vmem:[#allocation2 + $0x40] sm:$0xff] %vm571, %v547
      %581 = vst.msk [vmem:[#allocation2 + $0x48] sm:$0xff] %vm571, %v548
      %582 = vst.msk [vmem:[#allocation2 + $0x50] sm:$0xff] %vm571, %v549
      %583 = vst.msk [vmem:[#allocation2 + $0x58] sm:$0xff] %vm571, %v550
      %584 = vst.msk [vmem:[#allocation2 + $0x60] sm:$0xff] %vm571, %v551
      %585 = vst.msk [vmem:[#allocation2 + $0x68] sm:$0xff] %vm571, %v552
      %586 = vst.msk [vmem:[#allocation2 + $0x70] sm:$0xff] %vm571, %v553
      %587 = vst.msk [vmem:[#allocation2 + $0x78] sm:$0xff] %vm571, %v554
      %588 = vst.msk [vmem:[#allocation2 + $0x80] sm:$0xff] %vm571, %v555
      %589 = vst.msk [vmem:[#allocation2 + $0x88] sm:$0xff] %vm571, %v556
      %590 = vst.msk [vmem:[#allocation2 + $0x90] sm:$0xff] %vm571, %v557
      %591 = vst.msk [vmem:[#allocation2 + $0x98] sm:$0xff] %vm571, %v558
      %592 = vst.msk [vmem:[#allocation2 + $0xa0] sm:$0xff] %vm571, %v559
      %593 = vst.msk [vmem:[#allocation2 + $0xa8] sm:$0xff] %vm571, %v560
      %594 = vst.msk [vmem:[#allocation2 + $0xb0] sm:$0xff] %vm571, %v561
      %595 = vst.msk [vmem:[#allocation2 + $0xb8] sm:$0xff] %vm571, %v562
      %596 = vst.msk [vmem:[#allocation2 + $0xc0] sm:$0xff] %vm571, %v563
      %597 = vst.msk [vmem:[#allocation2 + $0xc8] sm:$0xff] %vm571, %v564
      %598 = vst.msk [vmem:[#allocation2 + $0xd0] sm:$0xff] %vm571, %v565
      %599 = vst.msk [vmem:[#allocation2 + $0xd8] sm:$0xff] %vm571, %v566
      %600 = vst.msk [vmem:[#allocation2 + $0xe0] sm:$0xff] %vm571, %v567
      %601 = vst.msk [vmem:[#allocation2 + $0xe8] sm:$0xff] %vm571, %v568
      %602 = vst.msk [vmem:[#allocation2 + $0xf0] sm:$0xff] %vm571, %v569
      %603 = vst.msk [vmem:[#allocation2 + $0xf8] sm:$0xff] %vm571, %v570
      // Predicated region
      $region37: #{tpu_custom_call.1} parent=31 // pred_check
        %p604 = pneg %p215
      $region38: #{tpu_custom_call.1} parent=31 // pred_check_branch
        %606 = sbr.rel (%p604) target = $region40
      $region39: #{tpu_custom_call.1} parent=31 // pred_region
        %v607 = vld [vmem:[#allocation2] sm:$0xff]
        %v608 = vld [vmem:[#allocation2 + $0x8] sm:$0xff]
        %v609 = vld [vmem:[#allocation2 + $0x10] sm:$0xff]
        %v610 = vld [vmem:[#allocation2 + $0x18] sm:$0xff]
        %v611 = vld [vmem:[#allocation2 + $0x20] sm:$0xff]
        %v612 = vld [vmem:[#allocation2 + $0x28] sm:$0xff]
        %v613 = vld [vmem:[#allocation2 + $0x30] sm:$0xff]
        %v614 = vld [vmem:[#allocation2 + $0x38] sm:$0xff]
        %v615 = vld [vmem:[#allocation2 + $0x40] sm:$0xff]
        %v616 = vld [vmem:[#allocation2 + $0x48] sm:$0xff]
        %v617 = vld [vmem:[#allocation2 + $0x50] sm:$0xff]
        %v618 = vld [vmem:[#allocation2 + $0x58] sm:$0xff]
        %v619 = vld [vmem:[#allocation2 + $0x60] sm:$0xff]
        %v620 = vld [vmem:[#allocation2 + $0x68] sm:$0xff]
        %v621 = vld [vmem:[#allocation2 + $0x70] sm:$0xff]
        %v622 = vld [vmem:[#allocation2 + $0x78] sm:$0xff]
        %v623 = vld [vmem:[#allocation2 + $0x80] sm:$0xff]
        %v624 = vld [vmem:[#allocation2 + $0x88] sm:$0xff]
        %v625 = vld [vmem:[#allocation2 + $0x90] sm:$0xff]
        %v626 = vld [vmem:[#allocation2 + $0x98] sm:$0xff]
        %v627 = vld [vmem:[#allocation2 + $0xa0] sm:$0xff]
        %v628 = vld [vmem:[#allocation2 + $0xa8] sm:$0xff]
        %v629 = vld [vmem:[#allocation2 + $0xb0] sm:$0xff]
        %v630 = vld [vmem:[#allocation2 + $0xb8] sm:$0xff]
        %v631 = vld [vmem:[#allocation2 + $0xc0] sm:$0xff]
        %v632 = vld [vmem:[#allocation2 + $0xc8] sm:$0xff]
        %v633 = vld [vmem:[#allocation2 + $0xd0] sm:$0xff]
        %v634 = vld [vmem:[#allocation2 + $0xd8] sm:$0xff]
        %v635 = vld [vmem:[#allocation2 + $0xe0] sm:$0xff]
        %v636 = vld [vmem:[#allocation2 + $0xe8] sm:$0xff]
        %v637 = vld [vmem:[#allocation2 + $0xf0] sm:$0xff]
        %v638 = vld [vmem:[#allocation2 + $0xf8] sm:$0xff]
        %v639 = vld [vmem:[%s2] sm:$0x1]
        %v641 = vperm.slane %v639, 0
        %v643 = vadd.f32 %v607, %v641
        %v644 = vadd.f32 %v608, %v641
        %v645 = vadd.f32 %v609, %v641
        %v646 = vadd.f32 %v610, %v641
        %v647 = vadd.f32 %v611, %v641
        %v648 = vadd.f32 %v612, %v641
        %v649 = vadd.f32 %v613, %v641
        %v650 = vadd.f32 %v614, %v641
        %v651 = vadd.f32 %v615, %v641
        %v652 = vadd.f32 %v616, %v641
        %v653 = vadd.f32 %v617, %v641
        %v654 = vadd.f32 %v618, %v641
        %v655 = vadd.f32 %v619, %v641
        %v656 = vadd.f32 %v620, %v641
        %v657 = vadd.f32 %v621, %v641
        %v658 = vadd.f32 %v622, %v641
        %v659 = vadd.f32 %v623, %v641
        %v660 = vadd.f32 %v624, %v641
        %v661 = vadd.f32 %v625, %v641
        %v662 = vadd.f32 %v626, %v641
        %v663 = vadd.f32 %v627, %v641
        %v664 = vadd.f32 %v628, %v641
        %v665 = vadd.f32 %v629, %v641
        %v666 = vadd.f32 %v630, %v641
        %v667 = vadd.f32 %v631, %v641
        %v668 = vadd.f32 %v632, %v641
        %v669 = vadd.f32 %v633, %v641
        %v670 = vadd.f32 %v634, %v641
        %v671 = vadd.f32 %v635, %v641
        %v672 = vadd.f32 %v636, %v641
        %v673 = vadd.f32 %v637, %v641
        %v674 = vadd.f32 %v638, %v641
        %v675 = vmax.f32 %v643, 0.0
        %v676 = vmax.f32 %v644, 0.0
        %v677 = vmax.f32 %v645, 0.0
        %v678 = vmax.f32 %v646, 0.0
        %v679 = vmax.f32 %v647, 0.0
        %v680 = vmax.f32 %v648, 0.0
        %v681 = vmax.f32 %v649, 0.0
        %v682 = vmax.f32 %v650, 0.0
        %v683 = vmax.f32 %v651, 0.0
        %v684 = vmax.f32 %v652, 0.0
        %v685 = vmax.f32 %v653, 0.0
        %v686 = vmax.f32 %v654, 0.0
        %v687 = vmax.f32 %v655, 0.0
        %v688 = vmax.f32 %v656, 0.0
        %v689 = vmax.f32 %v657, 0.0
        %v690 = vmax.f32 %v658, 0.0
        %v691 = vmax.f32 %v659, 0.0
        %v692 = vmax.f32 %v660, 0.0
        %v693 = vmax.f32 %v661, 0.0
        %v694 = vmax.f32 %v662, 0.0
        %v695 = vmax.f32 %v663, 0.0
        %v696 = vmax.f32 %v664, 0.0
        %v697 = vmax.f32 %v665, 0.0
        %v698 = vmax.f32 %v666, 0.0
        %v699 = vmax.f32 %v667, 0.0
        %v700 = vmax.f32 %v668, 0.0
        %v701 = vmax.f32 %v669, 0.0
        %v702 = vmax.f32 %v670, 0.0
        %v703 = vmax.f32 %v671, 0.0
        %v704 = vmax.f32 %v672, 0.0
        %v705 = vmax.f32 %v673, 0.0
        %v706 = vmax.f32 %v674, 0.0
        %v707 = vpack.c.bf16 %v675, %v675
        %v708 = vpack.c.bf16 %v676, %v676
        %v709 = vpack.c.bf16 %v677, %v677
        %v710 = vpack.c.bf16 %v678, %v678
        %v711 = vpack.c.bf16 %v679, %v679
        %v712 = vpack.c.bf16 %v680, %v680
        %v713 = vpack.c.bf16 %v681, %v681
        %v714 = vpack.c.bf16 %v682, %v682
        %v715 = vpack.c.bf16 %v683, %v683
        %v716 = vpack.c.bf16 %v684, %v684
        %v717 = vpack.c.bf16 %v685, %v685
        %v718 = vpack.c.bf16 %v686, %v686
        %v719 = vpack.c.bf16 %v687, %v687
        %v720 = vpack.c.bf16 %v688, %v688
        %v721 = vpack.c.bf16 %v689, %v689
        %v722 = vpack.c.bf16 %v690, %v690
        %v723 = vpack.c.bf16 %v691, %v691
        %v724 = vpack.c.bf16 %v692, %v692
        %v725 = vpack.c.bf16 %v693, %v693
        %v726 = vpack.c.bf16 %v694, %v694
        %v727 = vpack.c.bf16 %v695, %v695
        %v728 = vpack.c.bf16 %v696, %v696
        %v729 = vpack.c.bf16 %v697, %v697
        %v730 = vpack.c.bf16 %v698, %v698
        %v731 = vpack.c.bf16 %v699, %v699
        %v732 = vpack.c.bf16 %v700, %v700
        %v733 = vpack.c.bf16 %v701, %v701
        %v734 = vpack.c.bf16 %v702, %v702
        %v735 = vpack.c.bf16 %v703, %v703
        %v736 = vpack.c.bf16 %v704, %v704
        %v737 = vpack.c.bf16 %v705, %v705
        %v738 = vpack.c.bf16 %v706, %v706
        %vm739 = vcmask 125952
        %740 = vst.msk [vmem:[%s212] sm:$0xf] %vm739, %v707
        %741 = vst.msk [vmem:[%s212 + $0x4] sm:$0xf] %vm739, %v708
        %742 = vst.msk [vmem:[%s212 + $0x8] sm:$0xf] %vm739, %v709
        %743 = vst.msk [vmem:[%s212 + $0xc] sm:$0xf] %vm739, %v710
        %744 = vst.msk [vmem:[%s212 + $0x10] sm:$0xf] %vm739, %v711
        %745 = vst.msk [vmem:[%s212 + $0x14] sm:$0xf] %vm739, %v712
        %746 = vst.msk [vmem:[%s212 + $0x18] sm:$0xf] %vm739, %v713
        %747 = vst.msk [vmem:[%s212 + $0x1c] sm:$0xf] %vm739, %v714
        %748 = vst.msk [vmem:[%s212 + $0x20] sm:$0xf] %vm739, %v715
        %749 = vst.msk [vmem:[%s212 + $0x24] sm:$0xf] %vm739, %v716
        %750 = vst.msk [vmem:[%s212 + $0x28] sm:$0xf] %vm739, %v717
        %751 = vst.msk [vmem:[%s212 + $0x2c] sm:$0xf] %vm739, %v718
        %752 = vst.msk [vmem:[%s212 + $0x30] sm:$0xf] %vm739, %v719
        %753 = vst.msk [vmem:[%s212 + $0x34] sm:$0xf] %vm739, %v720
        %754 = vst.msk [vmem:[%s212 + $0x38] sm:$0xf] %vm739, %v721
        %755 = vst.msk [vmem:[%s212 + $0x3c] sm:$0xf] %vm739, %v722
        %756 = vst.msk [vmem:[%s212 + $0x40] sm:$0xf] %vm739, %v723
        %757 = vst.msk [vmem:[%s212 + $0x44] sm:$0xf] %vm739, %v724
        %758 = vst.msk [vmem:[%s212 + $0x48] sm:$0xf] %vm739, %v725
        %759 = vst.msk [vmem:[%s212 + $0x4c] sm:$0xf] %vm739, %v726
        %760 = vst.msk [vmem:[%s212 + $0x50] sm:$0xf] %vm739, %v727
        %761 = vst.msk [vmem:[%s212 + $0x54] sm:$0xf] %vm739, %v728
        %762 = vst.msk [vmem:[%s212 + $0x58] sm:$0xf] %vm739, %v729
        %763 = vst.msk [vmem:[%s212 + $0x5c] sm:$0xf] %vm739, %v730
        %764 = vst.msk [vmem:[%s212 + $0x60] sm:$0xf] %vm739, %v731
        %765 = vst.msk [vmem:[%s212 + $0x64] sm:$0xf] %vm739, %v732
        %766 = vst.msk [vmem:[%s212 + $0x68] sm:$0xf] %vm739, %v733
        %767 = vst.msk [vmem:[%s212 + $0x6c] sm:$0xf] %vm739, %v734
        %768 = vst.msk [vmem:[%s212 + $0x70] sm:$0xf] %vm739, %v735
        %769 = vst.msk [vmem:[%s212 + $0x74] sm:$0xf] %vm739, %v736
        %770 = vst.msk [vmem:[%s212 + $0x78] sm:$0xf] %vm739, %v737
        %771 = vst.msk [vmem:[%s212 + $0x7c] sm:$0xf] %vm739, %v738
      $region40: #{tpu_custom_call.1} parent=31 // pred_fallthru
        _
      %s772 = smul.u32 32, %s18
      %p773 = scmp.lt.s32.totalorder %s772, 63
      %s774 = scalar_select %p773, %s772, 63
      %s775 = smul.addr %s774, 4
      %s776 = scalar_lea.vmem %s3, %s775
      // Predicated region
      $region41: #{tpu_custom_call.1} parent=31 // pred_check
        %p777 = pneg %p119
      $region42: #{tpu_custom_call.1} parent=31 // pred_check_branch
        %779 = sbr.rel (%p777) target = $region44
      $region43: #{tpu_custom_call.1} parent=31 // pred_region
        %s780 = smul.u32 32, %s18
      $region44: #{tpu_custom_call.1} parent=31 // pred_fallthru
        _
    $region32: #{tpu_custom_call.1} parent=5 // pred_fallthru
      _
    %p781 = scmp.le.s32.totalorder 2, %s9
    // Predicated region
    $region45: #{tpu_custom_call.1} parent=5 // pred_check
      %p782 = pneg %p781
    $region46: #{tpu_custom_call.1} parent=5 // pred_check_branch
      %784 = sbr.rel (%p782) target = $region48
    $region47: #{tpu_custom_call.1} parent=5 // pred_region
      %s785 = ssub.s32 %s9, 2
      // Predicated region
      $region49: #{tpu_custom_call.1} parent=47 // pred_check
        %p786 = pneg %p125
      $region50: #{tpu_custom_call.1} parent=47 // pred_check_branch
        %788 = sbr.rel (%p786) target = $region52
      $region51: #{tpu_custom_call.1} parent=47 // pred_region
        %s789 = smul.u32 32, %s20
        %p790 = scmp.lt.s32.totalorder %s789, 63
        %s791 = scalar_select %p790, %s789, 63
        %s792 = smul.addr %s791, 4
        %s793 = scalar_lea.vmem %s3, %s792
      $region52: #{tpu_custom_call.1} parent=47 // pred_fallthru
        _
    $region48: #{tpu_custom_call.1} parent=5 // pred_fallthru
      _
  $region6: #{tpu_custom_call.1} parent=0 // loop_footer
    %s13 = sadd.s32 1, %s9
  $region7: #{tpu_custom_call.1} parent=0 // loop_footer_branch
    %8 = sbr.rel target = $region3
  $region8: #{tpu_custom_call.1} parent=0 // loop_exit
    _

</llo_original>
